<compile_context>
chip_gen: v7x
topology: tpu7x:2x2x1
jax: 0.10.0
libtpu: 0.0.40
codegen_flags: <defaults>
</compile_context>

<pallas_src>
import jax
import jax.numpy as jnp
from jax.experimental import pallas as pl
from jax.experimental.pallas import tpu as pltpu


_VMEM_LIMIT_BYTES = 44 << 20   # raised scoped limit; safe on 64 MiB-VMEM v7x
_VMEM_TILE_BUDGET = 36 << 20   # what tiles + resident weights may use
_MAX_BATCH_TILE = 1024         # tiles >= ~512 rows already sit near HBM roofline


def head_kernel(x_ref, w1_ref, b1_ref, w2_ref, b2_ref, o_ref):
    """fc1 -> +b1 -> ReLU -> (eval-BN folded into fc2) -> fc2 -> +b2."""
    # bf16 operands on the MXU, f32 accumulation; bias/ReLU on the VPU in f32.
    h = jnp.dot(x_ref[...], w1_ref[...], preferred_element_type=jnp.float32)
    h = jnp.maximum(h + b1_ref[...], 0.0)
    out = jnp.dot(h.astype(w2_ref.dtype), w2_ref[...],
                  preferred_element_type=jnp.float32)
    o_ref[...] = (out + b2_ref[...]).astype(o_ref.dtype)


def _round_up(n, m):
    return ((n + m - 1) // m) * m


def _choose_batch_tile(B, in_dim, H, C):
    """Byte-budget batch tile (multiple of 8 sublanes).

    Budget: double-buffered bf16 x tile + double-buffered f32 out tile +
    f32/bf16 (TB, H) intermediates + 2x-buffered resident weights/biases
    (constant index_map blocks still reserve two buffers) must fit the
    scoped-VMEM budget.
    """
    resident = 2 * (in_dim * H * 2 + H * C * 2 + H * 4 + C * 4)
    per_row = 2 * in_dim * 2 + 2 * C * 4 + H * 4 + H * 2
    avail = max(_VMEM_TILE_BUDGET - resident, 8 * per_row)
    tb_cap = max(8, min(_MAX_BATCH_TILE, (avail // per_row) // 8 * 8))

    n_steps = pl.cdiv(B, tb_cap)
    if B >= 16:
        n_steps = max(n_steps, 2)   # v7x: keep both TensorCores busy
    tb = min(tb_cap, _round_up(pl.cdiv(B, n_steps), 8))
    return max(tb, 8)


def prepare_params(params, eps=1e-5):
    """One-time host-side prep (hoisted out of the per-call path):
    fold eval-mode BatchNorm1d into fc2 and cast MXU operands to bf16."""
    scale = params["bn_gamma"] / jnp.sqrt(params["bn_var"] + eps)   # (H,)
    shift = params["bn_beta"] - params["bn_mean"] * scale           # (H,)
    w2_eff = scale[:, None] * params["w2"]                          # (H, C)
    b2_eff = shift @ params["w2"] + params["b2"]                    # (C,)
    H = params["w1"].shape[1]
    C = params["w2"].shape[1]
    return dict(
        w1=params["w1"].astype(jnp.bfloat16),                       # (in_dim, H)
        b1=params["b1"].reshape(1, H).astype(jnp.float32),          # (1, H)
        w2=w2_eff.astype(jnp.bfloat16),                             # (H, C)
        b2=b2_eff.reshape(1, C).astype(jnp.float32),                # (1, C)
    )


@jax.jit
def head_module_forward(x, prepared):
    """x: (B, in_dim) float; prepared: output of prepare_params(). -> (B, C) f32."""
    B, in_dim = x.shape
    H = prepared["w1"].shape[1]
    C = prepared["w2"].shape[1]

    # Ideally the upstream producer already emits bf16 features; under jit this
    # cast fuses with the producer, halving the x HBM read inside the kernel.
    x_bf16 = x.astype(jnp.bfloat16)

    TB = _choose_batch_tile(B, in_dim, H, C)
    grid = (pl.cdiv(B, TB),)   # ragged final block: OOB reads are per-row garbage,
                               # OOB output writes are masked -> correct.

    cost = pl.CostEstimate(
        flops=2 * B * H * (in_dim + C),
        transcendentals=0,
        bytes_accessed=(B * in_dim * 2 + in_dim * H * 2 + H * C * 2
                        + H * 4 + C * 4 + B * C * 4),
    )

    out = pl.pallas_call(
        head_kernel,
        out_shape=jax.ShapeDtypeStruct((B, C), jnp.float32),
        grid=grid,
        in_specs=[
            pl.BlockSpec((TB, in_dim), lambda i: (i, 0)),   # x: tiled over batch
            pl.BlockSpec((in_dim, H), lambda i: (0, 0)),    # w1: resident
            pl.BlockSpec((1, H), lambda i: (0, 0)),         # b1: resident
            pl.BlockSpec((H, C), lambda i: (0, 0)),         # w2 (BN-folded)
            pl.BlockSpec((1, C), lambda i: (0, 0)),         # b2 (BN-folded)
        ],
        out_specs=pl.BlockSpec((TB, C), lambda i: (i, 0)),  # native C, no pad/slice
        compiler_params=pltpu.CompilerParams(
            dimension_semantics=("parallel",),
            vmem_limit_bytes=_VMEM_LIMIT_BYTES,
        ),
        cost_estimate=cost,
    )(x_bf16, prepared["w1"], prepared["b1"], prepared["w2"], prepared["b2"])

    return out


def make_params(key, in_dim, num_classes, hidden=128):
    ks = jax.random.split(key, 8)
    w1 = jax.random.normal(ks[0], (in_dim, hidden), jnp.float32) * 0.05
    b1 = jax.random.normal(ks[1], (hidden,), jnp.float32) * 0.01
    w2 = jax.random.normal(ks[2], (hidden, num_classes), jnp.float32) * 0.05
    b2 = jax.random.normal(ks[3], (num_classes,), jnp.float32) * 0.01
    bn_gamma = 1.0 + 0.1 * jax.random.normal(ks[4], (hidden,), jnp.float32)
    bn_beta = 0.1 * jax.random.normal(ks[5], (hidden,), jnp.float32)
    bn_mean = 0.1 * jax.random.normal(ks[6], (hidden,), jnp.float32)
    bn_var = jnp.abs(jax.random.normal(ks[7], (hidden,), jnp.float32)) + 0.5
    return dict(w1=w1, b1=b1, w2=w2, b2=b2,
                bn_gamma=bn_gamma, bn_beta=bn_beta, bn_mean=bn_mean, bn_var=bn_var)


def reference_forward(x, params, eps=1e-5):
    h = jnp.maximum(x @ params["w1"] + params["b1"], 0.0)
    h = (h - params["bn_mean"]) / jnp.sqrt(params["bn_var"] + eps)
    h = h * params["bn_gamma"] + params["bn_beta"]
    return h @ params["w2"] + params["b2"]


if __name__ == "__main__":
    B, in_dim, num_classes = 8, 32, 10
    key = jax.random.PRNGKey(0)
    kx, kp = jax.random.split(key)
    x = jax.random.normal(kx, (B, in_dim), jnp.float32)
    params = make_params(kp, in_dim, num_classes)

    prepared = prepare_params(params)          # one-time fold + bf16 cast
    out = head_module_forward(x, prepared)
    out = jax.block_until_ready(out)

    ref = reference_forward(x, params)
    assert out.shape == (B, num_classes)
    # bf16 MXU operands -> looser tolerance than a pure-f32 path.
    assert jnp.allclose(out, ref, atol=2e-2, rtol=2e-2), "mismatch vs JAX reference"
    print("KERNEL_OK")
</pallas_src>

<mosaic_0001>
module attributes {stable_mosaic.version = 11 : i64} {
  func.func @head_kernel(%arg0: i32, %arg1: memref<8x32xbf16, #tpu.memory_space<vmem>>, %arg2: memref<32x128xbf16, #tpu.memory_space<vmem>>, %arg3: memref<1x128xf32, #tpu.memory_space<vmem>>, %arg4: memref<128x10xbf16, #tpu.memory_space<vmem>>, %arg5: memref<1x10xf32, #tpu.memory_space<vmem>>, %arg6: memref<8x10xf32, #tpu.memory_space<vmem>>) attributes {dimension_semantics = [#tpu.dimension_semantics<parallel>], iteration_bounds = array<i64: 1>, scalar_prefetch = 0 : i64, scratch_operands = 0 : i64, tpu.core_type = #tpu.core_type<tc>, window_params = [{transform_indices = @transform_0, window_bounds = array<i64: 8, 32>}, {pipeline_mode = #tpu.pipeline_mode<synchronous>, transform_indices = @transform_1, window_bounds = array<i64: 32, 128>}, {pipeline_mode = #tpu.pipeline_mode<synchronous>, transform_indices = @transform_2, window_bounds = array<i64: 1, 128>}, {pipeline_mode = #tpu.pipeline_mode<synchronous>, transform_indices = @transform_3, window_bounds = array<i64: 128, 10>}, {pipeline_mode = #tpu.pipeline_mode<synchronous>, transform_indices = @transform_4, window_bounds = array<i64: 1, 10>}, {transform_indices = @transform_5, window_bounds = array<i64: 8, 10>}]} {
    %c0 = arith.constant 0 : index
    %c0_0 = arith.constant 0 : index
    %0 = vector.load %arg1[%c0, %c0_0] : memref<8x32xbf16, #tpu.memory_space<vmem>>, vector<8x32xbf16>
    %c0_1 = arith.constant 0 : index
    %c0_2 = arith.constant 0 : index
    %1 = vector.load %arg2[%c0_1, %c0_2] : memref<32x128xbf16, #tpu.memory_space<vmem>>, vector<32x128xbf16>
    %cst = arith.constant dense<0.000000e+00> : vector<8x128xf32>
    %2 = tpu.matmul %0, %1, %cst {dimension_numbers = #tpu.dot_dimension_numbers<[1], [0], [0], [1], [0, 0, 1, 1], [], []>} : vector<8x32xbf16>, vector<32x128xbf16>, vector<8x128xf32> -> vector<8x128xf32>
    %c0_3 = arith.constant 0 : index
    %c0_4 = arith.constant 0 : index
    %3 = vector.load %arg3[%c0_3, %c0_4] : memref<1x128xf32, #tpu.memory_space<vmem>>, vector<1x128xf32>
    %4 = vector.broadcast %3 : vector<1x128xf32> to vector<8x128xf32>
    %5 = arith.addf %2, %4 : vector<8x128xf32>
    %cst_5 = arith.constant 0.000000e+00 : f32
    %6 = vector.broadcast %cst_5 : f32 to vector<8x128xf32>
    %7 = arith.maximumf %5, %6 : vector<8x128xf32>
    %8 = arith.truncf %7 : vector<8x128xf32> to vector<8x128xbf16>
    %c0_6 = arith.constant 0 : index
    %c0_7 = arith.constant 0 : index
    %9 = vector.load %arg4[%c0_6, %c0_7] : memref<128x10xbf16, #tpu.memory_space<vmem>>, vector<128x10xbf16>
    %cst_8 = arith.constant dense<0.000000e+00> : vector<8x10xf32>
    %10 = tpu.matmul %8, %9, %cst_8 {dimension_numbers = #tpu.dot_dimension_numbers<[1], [0], [0], [1], [0, 0, 1, 1], [], []>} : vector<8x128xbf16>, vector<128x10xbf16>, vector<8x10xf32> -> vector<8x10xf32>
    %c0_9 = arith.constant 0 : index
    %c0_10 = arith.constant 0 : index
    %11 = vector.load %arg5[%c0_9, %c0_10] : memref<1x10xf32, #tpu.memory_space<vmem>>, vector<1x10xf32>
    %12 = vector.broadcast %11 : vector<1x10xf32> to vector<8x10xf32>
    %13 = arith.addf %10, %12 : vector<8x10xf32>
    %c0_11 = arith.constant 0 : index
    %c0_12 = arith.constant 0 : index
    %14 = vector.load %arg6[%c0_11, %c0_12] : memref<8x10xf32, #tpu.memory_space<vmem>>, vector<8x10xf32>
    tpu.vector_store %arg6[%c0_11, %c0_12], %13 {strides = array<i32>} : memref<8x10xf32, #tpu.memory_space<vmem>>, vector<8x10xf32>,
    return
  }
  func.func @transform_0(%arg0: i32) -> (i32, i32) {
    %c0_i32 = arith.constant 0 : i32
    %c0_i32_0 = arith.constant 0 : i32
    return %arg0, %c0_i32 : i32, i32
  }
  func.func @transform_1(%arg0: i32) -> (i32, i32) {
    %c0_i32 = arith.constant 0 : i32
    %c0_i32_0 = arith.constant 0 : i32
    %c0_i32_1 = arith.constant 0 : i32
    return %c0_i32, %c0_i32_0 : i32, i32
  }
  func.func @transform_2(%arg0: i32) -> (i32, i32) {
    %c0_i32 = arith.constant 0 : i32
    %c0_i32_0 = arith.constant 0 : i32
    %c0_i32_1 = arith.constant 0 : i32
    return %c0_i32, %c0_i32_0 : i32, i32
  }
  func.func @transform_3(%arg0: i32) -> (i32, i32) {
    %c0_i32 = arith.constant 0 : i32
    %c0_i32_0 = arith.constant 0 : i32
    %c0_i32_1 = arith.constant 0 : i32
    return %c0_i32, %c0_i32_0 : i32, i32
  }
  func.func @transform_4(%arg0: i32) -> (i32, i32) {
    %c0_i32 = arith.constant 0 : i32
    %c0_i32_0 = arith.constant 0 : i32
    %c0_i32_1 = arith.constant 0 : i32
    return %c0_i32, %c0_i32_0 : i32, i32
  }
  func.func @transform_5(%arg0: i32) -> (i32, i32) {
    %c0_i32 = arith.constant 0 : i32
    %c0_i32_0 = arith.constant 0 : i32
    return %arg0, %c0_i32 : i32, i32
  }
}

</mosaic_0001>

<llo_original>
// kernel: head_module_forward.1
$region0: #{head_module_forward.1}
  #allocation0 [shape = 'u32[]', space=smem, size = 0x4, offset = 0x4, fixed_abs, tag = 'smem constant byte address 0x4 - core index']
  #allocation1 [shape = 'u32[144,128]{1,0:T(1,128)}', space=vmem, size = 0x12000, scoped, tag = 'internal scratch']
  %s0 = inlined_call_operand.vmem [shape: bf16[8,32], index: 0, kind: input, shape index: {}]
  %s1 = inlined_call_operand.vmem [shape: bf16[32,128], index: 1, kind: input, shape index: {}]
  %s2 = inlined_call_operand.vmem [shape: f32[1,128], index: 2, kind: input, shape index: {}]
  %s3 = inlined_call_operand.vmem [shape: bf16[128,10], index: 3, kind: input, shape index: {}]
  %s4 = inlined_call_operand.vmem [shape: f32[1,10], index: 4, kind: input, shape index: {}]
  %s5 = inlined_call_operand.hbm [shape: f32[8,10], index: 5, kind: output, shape index: {}]
  %s6 = sld [smem:[#allocation0]]
  $region30: #{head_module_forward.1} parent=0
    _
  %s8 = ssub.s32 1, %s6
  %s9 = scalar_select 0, %s8, %s6
  $region1: #{head_module_forward.1} parent=0
    #allocation2 [shape = 'u8[4096]{0}', space=vmem, size = 0x1000, scoped, tag = 'output window, operand 0, single buffered']
    #allocation3 [shape = 's32[1]{0}', space=sflag, size = 0x4, scoped, tag = 'scoped memory for head_module_forward.1']
    %10 = vsyncpa [#allocation3], 0
    // Predicated region
    $region2: #{head_module_forward.1} parent=1 // pred_check
      _
    $region3: #{head_module_forward.1} parent=1 // pred_check_branch
      %12 = sbr.rel (0) target = $region5
    $region4: #{head_module_forward.1} parent=1 // pred_region
      _
    $region5: #{head_module_forward.1} parent=1 // pred_fallthru
      _
    // Predicated region
    $region6: #{head_module_forward.1} parent=1 // pred_check
      _
    $region7: #{head_module_forward.1} parent=1 // pred_check_branch
      %14 = sbr.rel (0) target = $region9
    $region8: #{head_module_forward.1} parent=1 // pred_region
      _
    $region9: #{head_module_forward.1} parent=1 // pred_fallthru
      _
    // Predicated region
    $region10: #{head_module_forward.1} parent=1 // pred_check
      _
    $region11: #{head_module_forward.1} parent=1 // pred_check_branch
      %16 = sbr.rel (0) target = $region13
    $region12: #{head_module_forward.1} parent=1 // pred_region
      _
    $region13: #{head_module_forward.1} parent=1 // pred_fallthru
      _
    // Predicated region
    $region14: #{head_module_forward.1} parent=1 // pred_check
      _
    $region15: #{head_module_forward.1} parent=1 // pred_check_branch
      %18 = sbr.rel (0) target = $region17
    $region16: #{head_module_forward.1} parent=1 // pred_region
      _
    $region17: #{head_module_forward.1} parent=1 // pred_fallthru
      _
    // Predicated region
    $region18: #{head_module_forward.1} parent=1 // pred_check
      _
    $region19: #{head_module_forward.1} parent=1 // pred_check_branch
      %20 = sbr.rel (0) target = $region21
    $region20: #{head_module_forward.1} parent=1 // pred_region
      _
    $region21: #{head_module_forward.1} parent=1 // pred_fallthru
      _
    %v22 = vld [vmem:[%s0] sm:$0xf]
    %v23 = vld [vmem:[%s1] sm:$0xf]
    %v24 = vld [vmem:[%s1 + $0x4] sm:$0xf]
    %v25 = vld [vmem:[%s1 + $0x8] sm:$0xf]
    %v26 = vld [vmem:[%s1 + $0xc] sm:$0xf]
    %v27 = vld [vmem:[%s2] sm:$0x1]
    %v29 = vlaneseq
    %v30 = vshrl.u32 %v29, 7
    %v31 = vsub.s32 0, %v30
    %v32 = vrot.slane %v27, %v31
    %v38 = vunpack.c.l.b16 %v23
    %v39 = vunpack.c.l.b16 %v24
    %v40 = vunpack.c.l.b16 %v25
    %v41 = vunpack.c.l.b16 %v26
    %v42 = vpack.c.b16 %v39, %v38
    %v43 = vpack.c.b16 %v41, %v40
    %vm46 = vcmask 261120
    %v48 = vsel %vm46, %v22, 0
    %50 = vmatprep.subr.bf16.mxu0 0
    %51 = vmatpush1.bf16.msra.mxu0 %v42
    %52 = vmatprep.subr.bf16.mxu0 0
    %53 = vmatpush1.bf16.msra.mxu0 %v43
    %54 = vmatprep.subr.bf16.mxu0 0
    %55 = vmatpush1.bf16.msra.mxu0 0
    %56 = vmatprep.subr.bf16.mxu0 0
    %57 = vmatpush1.bf16.msra.mxu0 0
    %58 = vmatprep.subr.bf16.mxu0 0
    %59 = vmatpush1.bf16.msra.mxu0 0
    %60 = vmatprep.subr.bf16.mxu0 0
    %61 = vmatpush1.bf16.msra.mxu0 0
    %62 = vmatprep.subr.bf16.mxu0 0
    %63 = vmatpush1.bf16.msra.mxu0 0
    %64 = vmatprep.subr.bf16.mxu0 0
    %65 = vmatpush1.bf16.msra.mxu0 0
    %66 = vmatprep.subr.bf16.mxu0 0
    %67 = vmatpush1.bf16.msra.mxu0 0
    %68 = vmatprep.subr.bf16.mxu0 0
    %69 = vmatpush1.bf16.msra.mxu0 0
    %70 = vmatprep.subr.bf16.mxu0 0
    %71 = vmatpush1.bf16.msra.mxu0 0
    %72 = vmatprep.subr.bf16.mxu0 0
    %73 = vmatpush1.bf16.msra.mxu0 0
    %74 = vmatprep.subr.bf16.mxu0 0
    %75 = vmatpush1.bf16.msra.mxu0 0
    %76 = vmatprep.subr.bf16.mxu0 0
    %77 = vmatpush1.bf16.msra.mxu0 0
    %78 = vmatprep.subr.bf16.mxu0 0
    %79 = vmatpush1.bf16.msra.mxu0 0
    %80 = vmatprep.subr.bf16.mxu0 0
    %81 = vmatpush1.bf16.msra.mxu0 0
    %82 = vmatprep.mubr.bf16.mxu0 0
    %83 = vmatmul.mubr.bf16.gmra.mrb[0].mxu0 %v48
    %v84 = vpop.f32.mrb[0].mxu0
    %v85 = vadd.f32 %v32, %v84
    %v86 = vpop.f32.mrb[0].mxu0
    %v87 = vpop.f32.mrb[0].mxu0
    %v88 = vpop.f32.mrb[0].mxu0
    %89 = vdwg.mxu0
    %v90 = vmax.f32 %v85, 0.0
    %v91 = vpack.c.bf16 %v90, %v90
    %v92 = vld [vmem:[%s3] sm:$0xf]
    %v93 = vld [vmem:[%s3 + $0x4] sm:$0xf]
    %v94 = vld [vmem:[%s3 + $0x8] sm:$0xf]
    %v95 = vld [vmem:[%s3 + $0xc] sm:$0xf]
    %v96 = vld [vmem:[%s3 + $0x10] sm:$0xf]
    %v97 = vld [vmem:[%s3 + $0x14] sm:$0xf]
    %v98 = vld [vmem:[%s3 + $0x18] sm:$0xf]
    %v99 = vld [vmem:[%s3 + $0x1c] sm:$0xf]
    %v100 = vld [vmem:[%s3 + $0x20] sm:$0xf]
    %v101 = vld [vmem:[%s3 + $0x24] sm:$0xf]
    %v102 = vld [vmem:[%s3 + $0x28] sm:$0xf]
    %v103 = vld [vmem:[%s3 + $0x2c] sm:$0xf]
    %v104 = vld [vmem:[%s3 + $0x30] sm:$0xf]
    %v105 = vld [vmem:[%s3 + $0x34] sm:$0xf]
    %v106 = vld [vmem:[%s3 + $0x38] sm:$0xf]
    %v107 = vld [vmem:[%s3 + $0x3c] sm:$0xf]
    %v108 = vld [vmem:[%s4] sm:$0x1]
    %v110 = vlaneseq
    %v111 = vshrl.u32 %v110, 7
    %v112 = vsub.s32 0, %v111
    %v113 = vrot.slane %v108, %v112
    %v131 = vunpack.c.l.b16 %v92
    %v132 = vunpack.c.l.b16 %v93
    %v133 = vunpack.c.l.b16 %v94
    %v134 = vunpack.c.l.b16 %v95
    %v135 = vunpack.c.l.b16 %v96
    %v136 = vunpack.c.l.b16 %v97
    %v137 = vunpack.c.l.b16 %v98
    %v138 = vunpack.c.l.b16 %v99
    %v139 = vunpack.c.l.b16 %v100
    %v140 = vunpack.c.l.b16 %v101
    %v141 = vunpack.c.l.b16 %v102
    %v142 = vunpack.c.l.b16 %v103
    %v143 = vunpack.c.l.b16 %v104
    %v144 = vunpack.c.l.b16 %v105
    %v145 = vunpack.c.l.b16 %v106
    %v146 = vunpack.c.l.b16 %v107
    %v147 = vpack.c.b16 %v132, %v131
    %v148 = vpack.c.b16 %v134, %v133
    %v149 = vpack.c.b16 %v136, %v135
    %v150 = vpack.c.b16 %v138, %v137
    %v151 = vpack.c.b16 %v140, %v139
    %v152 = vpack.c.b16 %v142, %v141
    %v153 = vpack.c.b16 %v144, %v143
    %v154 = vpack.c.b16 %v146, %v145
    %163 = vmatprep.subr.bf16.mxu0 0
    %164 = vmatpush1.bf16.msra.mxu0 %v147
    %165 = vmatprep.subr.bf16.mxu0 0
    %166 = vmatpush1.bf16.msra.mxu0 %v148
    %167 = vmatprep.subr.bf16.mxu0 0
    %168 = vmatpush1.bf16.msra.mxu0 %v149
    %169 = vmatprep.subr.bf16.mxu0 0
    %170 = vmatpush1.bf16.msra.mxu0 %v150
    %171 = vmatprep.subr.bf16.mxu0 0
    %172 = vmatpush1.bf16.msra.mxu0 %v151
    %173 = vmatprep.subr.bf16.mxu0 0
    %174 = vmatpush1.bf16.msra.mxu0 %v152
    %175 = vmatprep.subr.bf16.mxu0 0
    %176 = vmatpush1.bf16.msra.mxu0 %v153
    %177 = vmatprep.subr.bf16.mxu0 0
    %178 = vmatpush1.bf16.msra.mxu0 %v154
    %179 = vmatprep.subr.bf16.mxu0 0
    %180 = vmatpush1.bf16.msra.mxu0 0
    %181 = vmatprep.subr.bf16.mxu0 0
    %182 = vmatpush1.bf16.msra.mxu0 0
    %183 = vmatprep.subr.bf16.mxu0 0
    %184 = vmatpush1.bf16.msra.mxu0 0
    %185 = vmatprep.subr.bf16.mxu0 0
    %186 = vmatpush1.bf16.msra.mxu0 0
    %187 = vmatprep.subr.bf16.mxu0 0
    %188 = vmatpush1.bf16.msra.mxu0 0
    %189 = vmatprep.subr.bf16.mxu0 0
    %190 = vmatpush1.bf16.msra.mxu0 0
    %191 = vmatprep.subr.bf16.mxu0 0
    %192 = vmatpush1.bf16.msra.mxu0 0
    %193 = vmatprep.subr.bf16.mxu0 0
    %194 = vmatpush1.bf16.msra.mxu0 0
    %195 = vmatprep.mubr.bf16.mxu0 0
    %196 = vmatmul.mubr.bf16.gmra.mrb[0].mxu0 %v91
    %v197 = vpop.f32.mrb[0].mxu0
    %v198 = vadd.f32 %v113, %v197
    %v199 = vpop.f32.mrb[0].mxu0
    %v200 = vpop.f32.mrb[0].mxu0
    %v201 = vpop.f32.mrb[0].mxu0
    %202 = vdwg.mxu0
    %vm203 = vcmask 80896
    %204 = vst.msk [vmem:[#allocation2] sm:$0xff] %vm203, %v198
    // Predicated region
    $region22: #{head_module_forward.1} parent=1 // pred_check
      _
    $region23: #{head_module_forward.1} parent=1 // pred_check_branch
      %206 = sbr.rel (0) target = $region25
    $region24: #{head_module_forward.1} parent=1 // pred_region
      %s208 = ssub.s32 128, 128
      %209 = vsyncadd [#allocation3], %s208
      %s211 = sshll.u32 [#allocation2], 4
      %s212 = int_to_ptr.vmem [resolvable:$true] %s211
      %214 = dma.vmem_to_hbm [thread:$0]  %s212, 128, %s5, [#allocation3]
    $region25: #{head_module_forward.1} parent=1 // pred_fallthru
      _
    // Predicated region
    $region26: #{head_module_forward.1} parent=1 // pred_check
      _
    $region27: #{head_module_forward.1} parent=1 // pred_check_branch
      %216 = sbr.rel (0) target = $region29
    $region28: #{head_module_forward.1} parent=1 // pred_region
      %217 = dma.done [#allocation3], 128
    $region29: #{head_module_forward.1} parent=1 // pred_fallthru
      _
    %218 = vsyncpa [#allocation3], 1

</llo_original>
